<compile_context>
chip_gen: v5e
topology: v5e:2x2
jax: 0.10.0
libtpu: 0.0.40
codegen_flags: <defaults>
</compile_context>

<pallas_src>
import jax
import jax.numpy as jnp
from jax.experimental import pallas as pl
from jax.experimental.pallas import tpu as pltpu

# ---------------- sizes (small, consistent with the module) ----------------
B = 2            # batch
CIN = 3          # RGB channels (normalization constants are per-RGB-channel)
H = W = 16       # input spatial size == interpolate target size
HW = H * W
Q = 8            # DETR object queries
NUM_CLASSES = 4  # semantic classes kept after dropping "no object"
CP1 = NUM_CLASSES + 1
MH = MW = 8      # pred_masks spatial resolution
MHW = MH * MW
D = 32           # synthetic head hidden size
NOUT = CP1 + MHW


# ---------------- the single fused kernel ----------------
def _fused_kernel(px_ref, wf_ref, qe_ref, whead_ref, bhead_ref, krn_ref, out_ref):
    # px_ref    : (B, CIN, H*W)  raw pixels in [0, 255]
    # wf_ref    : (CIN, D)   normalization scale pre-folded (scale[:,None] * wf)
    # qe_ref    : (Q, D)     query embedding with normalization bias pre-folded
    # whead_ref : (D, NOUT)  unsplit head weight   bhead_ref: (1, NOUT)
    # krn_ref   : (MHW, H*W) = kron(ah, aw).T  (fused separable bilinear resize)
    # out_ref   : (B, H*W) int32

    # --- 1)+2) normalization + mean-pool front end + synthetic head ----------
    # mean(x*s + b) == mean(x)*s + b, and the affine is folded into wf/qe in
    # the wrapper, so only the raw spatial mean is needed here.
    # TODO(synk): the real DETR-ResNet backbone + transformer (self.model) is
    # not translated; if it ever is, reinstate the per-pixel affine on px.
    feat = jnp.sum(px_ref[...], axis=-1) * (1.0 / HW)              # (B, CIN)

    # tiny CIN=3 contraction: unrolled broadcast-MACs (cheaper than an MXU pass)
    proj = (feat[:, 0:1] * wf_ref[0:1, :]
            + feat[:, 1:2] * wf_ref[1:2, :]
            + feat[:, 2:3] * wf_ref[2:3, :])                       # (B, D)

    # stack the per-batch query states -> ONE head matmul (B*Q, D)@(D, NOUT)
    pre0 = qe_ref[...] + proj[0:1, :]                              # (Q, D)
    pre1 = qe_ref[...] + proj[1:2, :]                              # (Q, D)
    h_all = jnp.tanh(jnp.concatenate([pre0, pre1], axis=0))        # (B*Q, D)

    out_all = jnp.dot(h_all, whead_ref[...],
                      preferred_element_type=jnp.float32) + bhead_ref[...]  # (B*Q, NOUT)

    logits = out_all[:, :CP1]                                      # (B*Q, CP1)
    mask_logits = out_all[:, CP1:]                                 # (B*Q, MHW)

    # --- 3) post_process_semantic_segmentation ------------------------------
    # softmax over classes (exact division), drop trailing "no object" class
    m = jnp.max(logits, axis=-1, keepdims=True)
    e = jnp.exp(logits - m)
    classes = e[:, :NUM_CLASSES] / jnp.sum(e, axis=-1, keepdims=True)  # (B*Q, C)

    # numerically stable sigmoid: exp of a non-positive argument, exact div
    z = jnp.exp(-jnp.abs(mask_logits))
    inv = 1.0 / (1.0 + z)
    masks = jnp.where(mask_logits >= 0.0, inv, z * inv)            # (B*Q, MHW)

    # einsum 'bqc,bqhw->bchw' for BOTH batches as one block-diagonal matmul:
    #   [[c0^T  0 ], [0  c1^T]] @ masks  ->  (B*C, MHW)
    ct0 = classes[:Q, :].T                                         # (C, Q)
    ct1 = classes[Q:, :].T                                         # (C, Q)
    zcq = jnp.zeros((NUM_CLASSES, Q), jnp.float32)
    cbd = jnp.concatenate(
        [jnp.concatenate([ct0, zcq], axis=1),
         jnp.concatenate([zcq, ct1], axis=1)], axis=0)             # (B*C, B*Q)
    seg_all = jnp.dot(cbd, masks, preferred_element_type=jnp.float32)  # (B*C, MHW)

    # bilinear resize (align_corners=False): both separable resizes fused into
    # one Kronecker matrix -> single batched lane-dense (B*C, H*W) matmul
    up = jnp.dot(seg_all, krn_ref[...],
                 preferred_element_type=jnp.float32)               # (B*C, HW)

    # argmax over the class axis per 4-row group (first index wins on ties)
    idx_rows = []
    for b in range(B):                                             # B == 2, unrolled
        base = b * NUM_CLASSES
        best_val = up[base:base + 1, :]
        best_idx = jnp.zeros((1, HW), jnp.int32)
        for c in range(1, NUM_CLASSES):
            row = up[base + c:base + c + 1, :]
            gt = row > best_val
            best_val = jnp.where(gt, row, best_val)
            best_idx = jnp.where(gt, jnp.int32(c), best_idx)
        idx_rows.append(best_idx)
    # single unmasked lane-dense (B, HW) store
    out_ref[...] = jnp.concatenate(idx_rows, axis=0)


# ---------------- bilinear weight matrices (align_corners=False) ----------------
def bilinear_matrix(out_size, in_size):
    i = jnp.arange(out_size, dtype=jnp.float32)
    src = (i + 0.5) * (in_size / out_size) - 0.5
    src = jnp.maximum(src, 0.0)                 # PyTorch clamps negative src to 0
    i0 = jnp.floor(src)
    frac = src - i0
    i0 = jnp.minimum(i0.astype(jnp.int32), in_size - 1)
    i1 = jnp.minimum(i0 + 1, in_size - 1)
    rows = jnp.arange(out_size)
    a = jnp.zeros((out_size, in_size), jnp.float32)
    a = a.at[rows, i0].add(1.0 - frac)
    a = a.at[rows, i1].add(frac)
    return a


# ---------------- wrappers ----------------
def fused_forward(pixel_values, params):
    """Full batch semantic map (B, H, W) int32 via one pallas_call."""
    n_mean = jnp.array([0.485 * 255, 0.456 * 255, 0.406 * 255], jnp.float32)
    n_std = jnp.array([0.229 * 255, 0.224 * 255, 0.225 * 255], jnp.float32)
    scale = 1.0 / n_std                        # (CIN,)
    bias = -n_mean / n_std                     # (CIN,)

    # Fold the per-channel affine into the head (exact for the mean-pool front
    # end):   proj = feat_raw @ (scale[:,None]*wf) + bias @ wf
    wf_scaled = params["wf"] * scale[:, None]                         # (CIN, D)
    qe_eff = params["query_embed"] + bias[None, :] @ params["wf"]     # (Q, D)

    px = pixel_values.reshape(B, CIN, HW)                             # lane-dense pixels

    ah = bilinear_matrix(H, MH)                                       # (H, MH)
    aw = bilinear_matrix(W, MW)                                       # (W, MW)
    krn = jnp.kron(ah, aw).T                                          # (MH*MW, H*W)

    vmem = lambda: pl.BlockSpec(memory_space=pltpu.MemorySpace.VMEM)
    seg_flat = pl.pallas_call(
        _fused_kernel,
        out_shape=jax.ShapeDtypeStruct((B, HW), jnp.int32),
        # no grid: single launch, every operand is one full VMEM block
        in_specs=[vmem() for _ in range(6)],
        out_specs=vmem(),
        cost_estimate=pl.CostEstimate(flops=350_000,
                                      transcendentals=1_700,
                                      bytes_accessed=90_000),
    )(px, wf_scaled, qe_eff, params["w_head"], params["b_head"], krn)

    return seg_flat.reshape(B, H, W)


@jax.jit
def forward(pixel_values, params):
    return fused_forward(pixel_values, params)[0]            # semantic_map[0]


if __name__ == "__main__":
    key = jax.random.PRNGKey(0)
    k_x, k_wf, k_q, k_wh, k_bh = jax.random.split(key, 5)

    pixel_values = jax.random.uniform(k_x, (B, CIN, H, W), jnp.float32, 0.0, 255.0)
    params = {
        "wf": 0.5 * jax.random.normal(k_wf, (CIN, D), jnp.float32),
        "query_embed": 0.5 * jax.random.normal(k_q, (Q, D), jnp.float32),
        "w_head": 0.3 * jax.random.normal(k_wh, (D, NOUT), jnp.float32),
        "b_head": 0.1 * jax.random.normal(k_bh, (1, NOUT), jnp.float32),
    }

    semantic_map = jax.block_until_ready(forward(pixel_values, params))
    assert semantic_map.shape == (H, W) and semantic_map.dtype == jnp.int32

    # ---- consistency check vs a pure-JAX reference of the whole pipeline ----
    seg_pal = jax.block_until_ready(jax.jit(fused_forward)(pixel_values, params))

    n_mean = jnp.array([0.485 * 255, 0.456 * 255, 0.406 * 255], jnp.float32)
    n_std = jnp.array([0.229 * 255, 0.224 * 255, 0.225 * 255], jnp.float32)
    x_ref = (pixel_values - n_mean[None, :, None, None]) / n_std[None, :, None, None]
    feat = jnp.mean(x_ref, axis=(2, 3))
    h = jnp.tanh(params["query_embed"][None] + (feat @ params["wf"])[:, None, :])
    out = h.reshape(B * Q, D) @ params["w_head"] + params["b_head"]
    logits_r = out[:, :CP1].reshape(B, Q, CP1)
    masks_r = out[:, CP1:].reshape(B, Q, MH, MW)
    classes_r = jax.nn.softmax(logits_r, axis=-1)[..., :NUM_CLASSES]
    probs_r = jax.nn.sigmoid(masks_r)
    seg_r = jnp.einsum('bqc,bqhw->bchw', classes_r, probs_r)
    seg_r = jnp.einsum('bchw,Ww->bchW', seg_r, bilinear_matrix(W, MW))
    seg_r = jnp.einsum('bchW,Hh->bcHW', seg_r, bilinear_matrix(H, MH))

    # Tolerant argmax check: the class chosen by the kernel must score within a
    # small tolerance of the reference per-pixel maximum (f32 MXU matmul
    # precision differs slightly from the XLA reference path).
    taken = jnp.take_along_axis(seg_r, seg_pal[:, None, :, :], axis=1)[:, 0]
    gap = seg_r.max(axis=1) - taken                                   # >= 0
    assert bool(jnp.all(gap <= 3e-2)), f"argmax score gap too large: {float(gap.max()):.5f}"
    assert bool(jnp.all(seg_pal[0] == semantic_map))

    print("KERNEL_OK")
</pallas_src>

<mosaic_0001>
module attributes {stable_mosaic.version = 11 : i64} {
  func.func @_fused_kernel(%arg0: memref<2x3x256xf32, #tpu.memory_space<vmem>>, %arg1: memref<3x32xf32, #tpu.memory_space<vmem>>, %arg2: memref<8x32xf32, #tpu.memory_space<vmem>>, %arg3: memref<32x69xf32, #tpu.memory_space<vmem>>, %arg4: memref<1x69xf32, #tpu.memory_space<vmem>>, %arg5: memref<64x256xf32, #tpu.memory_space<vmem>>, %arg6: memref<2x256xi32, #tpu.memory_space<vmem>>) attributes {dimension_semantics = [], scalar_prefetch = 0 : i64, scratch_operands = 0 : i64, tpu.core_type = #tpu.core_type<tc>} {
    %c0 = arith.constant 0 : index
    %c0_0 = arith.constant 0 : index
    %c0_1 = arith.constant 0 : index
    %0 = vector.load %arg0[%c0, %c0_0, %c0_1] : memref<2x3x256xf32, #tpu.memory_space<vmem>>, vector<2x3x256xf32>
    %cst = arith.constant dense<0.000000e+00> : vector<2x3xf32>
    %1 = vector.multi_reduction <add>, %0, %cst [2] : vector<2x3x256xf32> to vector<2x3xf32>
    %cst_2 = arith.constant 3.906250e-03 : f32
    %2 = vector.broadcast %cst_2 : f32 to vector<2x3xf32>
    %3 = arith.mulf %1, %2 : vector<2x3xf32>
    %4 = vector.extract_strided_slice %3 {offsets = [0, 0], sizes = [2, 1], strides = [1, 1]} : vector<2x3xf32> to vector<2x1xf32>
    %c0_3 = arith.constant 0 : index
    %c0_4 = arith.constant 0 : index
    %5 = vector.load %arg1[%c0_3, %c0_4] : memref<3x32xf32, #tpu.memory_space<vmem>>, vector<1x32xf32>
    %6 = vector.broadcast %4 : vector<2x1xf32> to vector<2x32xf32>
    %7 = vector.broadcast %5 : vector<1x32xf32> to vector<2x32xf32>
    %8 = arith.mulf %6, %7 : vector<2x32xf32>
    %9 = vector.extract_strided_slice %3 {offsets = [0, 1], sizes = [2, 1], strides = [1, 1]} : vector<2x3xf32> to vector<2x1xf32>
    %c1 = arith.constant 1 : index
    %c0_5 = arith.constant 0 : index
    %10 = vector.load %arg1[%c1, %c0_5] : memref<3x32xf32, #tpu.memory_space<vmem>>, vector<1x32xf32>
    %11 = vector.broadcast %9 : vector<2x1xf32> to vector<2x32xf32>
    %12 = vector.broadcast %10 : vector<1x32xf32> to vector<2x32xf32>
    %13 = arith.mulf %11, %12 : vector<2x32xf32>
    %14 = arith.addf %8, %13 : vector<2x32xf32>
    %15 = vector.extract_strided_slice %3 {offsets = [0, 2], sizes = [2, 1], strides = [1, 1]} : vector<2x3xf32> to vector<2x1xf32>
    %c2 = arith.constant 2 : index
    %c0_6 = arith.constant 0 : index
    %16 = vector.load %arg1[%c2, %c0_6] : memref<3x32xf32, #tpu.memory_space<vmem>>, vector<1x32xf32>
    %17 = vector.broadcast %15 : vector<2x1xf32> to vector<2x32xf32>
    %18 = vector.broadcast %16 : vector<1x32xf32> to vector<2x32xf32>
    %19 = arith.mulf %17, %18 : vector<2x32xf32>
    %20 = arith.addf %14, %19 : vector<2x32xf32>
    %c0_7 = arith.constant 0 : index
    %c0_8 = arith.constant 0 : index
    %21 = vector.load %arg2[%c0_7, %c0_8] : memref<8x32xf32, #tpu.memory_space<vmem>>, vector<8x32xf32>
    %22 = vector.extract_strided_slice %20 {offsets = [0, 0], sizes = [1, 32], strides = [1, 1]} : vector<2x32xf32> to vector<1x32xf32>
    %23 = vector.broadcast %22 : vector<1x32xf32> to vector<8x32xf32>
    %24 = arith.addf %21, %23 : vector<8x32xf32>
    %c0_9 = arith.constant 0 : index
    %c0_10 = arith.constant 0 : index
    %25 = vector.load %arg2[%c0_9, %c0_10] : memref<8x32xf32, #tpu.memory_space<vmem>>, vector<8x32xf32>
    %26 = vector.extract_strided_slice %20 {offsets = [1, 0], sizes = [1, 32], strides = [1, 1]} : vector<2x32xf32> to vector<1x32xf32>
    %27 = vector.broadcast %26 : vector<1x32xf32> to vector<8x32xf32>
    %28 = arith.addf %25, %27 : vector<8x32xf32>
    %29 = tpu.concatenate %24, %28 in 0 : vector<8x32xf32>, vector<8x32xf32> -> vector<16x32xf32>
    %30 = math.tanh %29 : vector<16x32xf32>
    %c0_11 = arith.constant 0 : index
    %c0_12 = arith.constant 0 : index
    %31 = vector.load %arg3[%c0_11, %c0_12] : memref<32x69xf32, #tpu.memory_space<vmem>>, vector<32x69xf32>
    %cst_13 = arith.constant dense<0.000000e+00> : vector<16x69xf32>
    %32 = tpu.matmul %30, %31, %cst_13 {dimension_numbers = #tpu.dot_dimension_numbers<[1], [0], [0], [1], [0, 0, 1, 1], [], []>} : vector<16x32xf32>, vector<32x69xf32>, vector<16x69xf32> -> vector<16x69xf32>
    %c0_14 = arith.constant 0 : index
    %c0_15 = arith.constant 0 : index
    %33 = vector.load %arg4[%c0_14, %c0_15] : memref<1x69xf32, #tpu.memory_space<vmem>>, vector<1x69xf32>
    %34 = vector.broadcast %33 : vector<1x69xf32> to vector<16x69xf32>
    %35 = arith.addf %32, %34 : vector<16x69xf32>
    %36 = vector.extract_strided_slice %35 {offsets = [0, 0], sizes = [16, 5], strides = [1, 1]} : vector<16x69xf32> to vector<16x5xf32>
    %37 = vector.extract_strided_slice %35 {offsets = [0, 5], sizes = [16, 64], strides = [1, 1]} : vector<16x69xf32> to vector<16x64xf32>
    %cst_16 = arith.constant dense<0xFF800000> : vector<16xf32>
    %38 = vector.multi_reduction <maximumf>, %36, %cst_16 [1] : vector<16x5xf32> to vector<16xf32>
    %39 = vector.shape_cast %38 : vector<16xf32> to vector<16x1xf32>
    %40 = vector.broadcast %39 : vector<16x1xf32> to vector<16x5xf32>
    %41 = arith.subf %36, %40 : vector<16x5xf32>
    %42 = math.exp %41 : vector<16x5xf32>
    %43 = vector.extract_strided_slice %42 {offsets = [0, 0], sizes = [16, 4], strides = [1, 1]} : vector<16x5xf32> to vector<16x4xf32>
    %cst_17 = arith.constant dense<0.000000e+00> : vector<16xf32>
    %44 = vector.multi_reduction <add>, %42, %cst_17 [1] : vector<16x5xf32> to vector<16xf32>
    %45 = vector.shape_cast %44 : vector<16xf32> to vector<16x1xf32>
    %46 = vector.broadcast %45 : vector<16x1xf32> to vector<16x4xf32>
    %47 = arith.divf %43, %46 : vector<16x4xf32>
    %48 = math.absf %37 : vector<16x64xf32>
    %cst_18 = arith.constant 0.000000e+00 : f32
    %49 = vector.broadcast %cst_18 : f32 to vector<16x64xf32>
    %50 = arith.subf %49, %48 : vector<16x64xf32>
    %51 = math.exp %50 : vector<16x64xf32>
    %cst_19 = arith.constant 1.000000e+00 : f32
    %52 = vector.broadcast %cst_19 : f32 to vector<16x64xf32>
    %53 = arith.addf %52, %51 : vector<16x64xf32>
    %cst_20 = arith.constant 1.000000e+00 : f32
    %54 = vector.broadcast %cst_20 : f32 to vector<16x64xf32>
    %55 = arith.divf %54, %53 : vector<16x64xf32>
    %cst_21 = arith.constant 0.000000e+00 : f32
    %56 = vector.broadcast %cst_21 : f32 to vector<16x64xf32>
    %57 = arith.cmpf oge, %37, %56 : vector<16x64xf32>
    %58 = arith.mulf %51, %55 : vector<16x64xf32>
    %59 = arith.select %57, %55, %58 : vector<16x64xi1>, vector<16x64xf32>
    %60 = vector.extract_strided_slice %47 {offsets = [0, 0], sizes = [8, 4], strides = [1, 1]} : vector<16x4xf32> to vector<8x4xf32>
    %61 = tpu.transpose %60, [1, 0] : vector<8x4xf32> -> vector<4x8xf32>
    %62 = vector.extract_strided_slice %47 {offsets = [8, 0], sizes = [8, 4], strides = [1, 1]} : vector<16x4xf32> to vector<8x4xf32>
    %63 = tpu.transpose %62, [1, 0] : vector<8x4xf32> -> vector<4x8xf32>
    %cst_22 = arith.constant 0.000000e+00 : f32
    %64 = vector.broadcast %cst_22 : f32 to vector<4x8xf32>
    %65 = tpu.concatenate %61, %64 in 1 : vector<4x8xf32>, vector<4x8xf32> -> vector<4x16xf32>
    %66 = tpu.concatenate %64, %63 in 1 : vector<4x8xf32>, vector<4x8xf32> -> vector<4x16xf32>
    %67 = tpu.concatenate %65, %66 in 0 : vector<4x16xf32>, vector<4x16xf32> -> vector<8x16xf32>
    %cst_23 = arith.constant dense<0.000000e+00> : vector<8x64xf32>
    %68 = tpu.matmul %67, %59, %cst_23 {dimension_numbers = #tpu.dot_dimension_numbers<[1], [0], [0], [1], [0, 0, 1, 1], [], []>} : vector<8x16xf32>, vector<16x64xf32>, vector<8x64xf32> -> vector<8x64xf32>
    %c0_24 = arith.constant 0 : index
    %c0_25 = arith.constant 0 : index
    %69 = vector.load %arg5[%c0_24, %c0_25] : memref<64x256xf32, #tpu.memory_space<vmem>>, vector<64x256xf32>
    %cst_26 = arith.constant dense<0.000000e+00> : vector<8x256xf32>
    %70 = tpu.matmul %68, %69, %cst_26 {dimension_numbers = #tpu.dot_dimension_numbers<[1], [0], [0], [1], [0, 0, 1, 1], [], []>} : vector<8x64xf32>, vector<64x256xf32>, vector<8x256xf32> -> vector<8x256xf32>
    %71 = vector.extract_strided_slice %70 {offsets = [0, 0], sizes = [1, 256], strides = [1, 1]} : vector<8x256xf32> to vector<1x256xf32>
    %c0_i32 = arith.constant 0 : i32
    %72 = vector.broadcast %c0_i32 : i32 to vector<1x256xi32>
    %73 = vector.extract_strided_slice %70 {offsets = [1, 0], sizes = [1, 256], strides = [1, 1]} : vector<8x256xf32> to vector<1x256xf32>
    %74 = arith.cmpf ogt, %73, %71 : vector<1x256xf32>
    %75 = arith.select %74, %73, %71 : vector<1x256xi1>, vector<1x256xf32>
    %c1_i32 = arith.constant 1 : i32
    %76 = vector.broadcast %c1_i32 : i32 to vector<1x256xi32>
    %77 = arith.select %74, %76, %72 : vector<1x256xi1>, vector<1x256xi32>
    %78 = vector.extract_strided_slice %70 {offsets = [2, 0], sizes = [1, 256], strides = [1, 1]} : vector<8x256xf32> to vector<1x256xf32>
    %79 = arith.cmpf ogt, %78, %75 : vector<1x256xf32>
    %80 = arith.select %79, %78, %75 : vector<1x256xi1>, vector<1x256xf32>
    %c2_i32 = arith.constant 2 : i32
    %81 = vector.broadcast %c2_i32 : i32 to vector<1x256xi32>
    %82 = arith.select %79, %81, %77 : vector<1x256xi1>, vector<1x256xi32>
    %83 = vector.extract_strided_slice %70 {offsets = [3, 0], sizes = [1, 256], strides = [1, 1]} : vector<8x256xf32> to vector<1x256xf32>
    %84 = arith.cmpf ogt, %83, %80 : vector<1x256xf32>
    %c3_i32 = arith.constant 3 : i32
    %85 = vector.broadcast %c3_i32 : i32 to vector<1x256xi32>
    %86 = arith.select %84, %85, %82 : vector<1x256xi1>, vector<1x256xi32>
    %87 = vector.extract_strided_slice %70 {offsets = [4, 0], sizes = [1, 256], strides = [1, 1]} : vector<8x256xf32> to vector<1x256xf32>
    %c0_i32_27 = arith.constant 0 : i32
    %88 = vector.broadcast %c0_i32_27 : i32 to vector<1x256xi32>
    %89 = vector.extract_strided_slice %70 {offsets = [5, 0], sizes = [1, 256], strides = [1, 1]} : vector<8x256xf32> to vector<1x256xf32>
    %90 = arith.cmpf ogt, %89, %87 : vector<1x256xf32>
    %91 = arith.select %90, %89, %87 : vector<1x256xi1>, vector<1x256xf32>
    %c1_i32_28 = arith.constant 1 : i32
    %92 = vector.broadcast %c1_i32_28 : i32 to vector<1x256xi32>
    %93 = arith.select %90, %92, %88 : vector<1x256xi1>, vector<1x256xi32>
    %94 = vector.extract_strided_slice %70 {offsets = [6, 0], sizes = [1, 256], strides = [1, 1]} : vector<8x256xf32> to vector<1x256xf32>
    %95 = arith.cmpf ogt, %94, %91 : vector<1x256xf32>
    %96 = arith.select %95, %94, %91 : vector<1x256xi1>, vector<1x256xf32>
    %c2_i32_29 = arith.constant 2 : i32
    %97 = vector.broadcast %c2_i32_29 : i32 to vector<1x256xi32>
    %98 = arith.select %95, %97, %93 : vector<1x256xi1>, vector<1x256xi32>
    %99 = vector.extract_strided_slice %70 {offsets = [7, 0], sizes = [1, 256], strides = [1, 1]} : vector<8x256xf32> to vector<1x256xf32>
    %100 = arith.cmpf ogt, %99, %96 : vector<1x256xf32>
    %c3_i32_30 = arith.constant 3 : i32
    %101 = vector.broadcast %c3_i32_30 : i32 to vector<1x256xi32>
    %102 = arith.select %100, %101, %98 : vector<1x256xi1>, vector<1x256xi32>
    %103 = tpu.concatenate %86, %102 in 0 : vector<1x256xi32>, vector<1x256xi32> -> vector<2x256xi32>
    %c0_31 = arith.constant 0 : index
    %c0_32 = arith.constant 0 : index
    %104 = vector.load %arg6[%c0_31, %c0_32] : memref<2x256xi32, #tpu.memory_space<vmem>>, vector<2x256xi32>
    tpu.vector_store %arg6[%c0_31, %c0_32], %103 {strides = array<i32>} : memref<2x256xi32, #tpu.memory_space<vmem>>, vector<2x256xi32>,
    return
  }
}

</mosaic_0001>

<llo_original>
// kernel: squeeze.1
$region0: #{squeeze.1}
  %s0 = inlined_call_operand.vmem [shape: s32[256], index: 0, kind: input, shape index: {}]
  %s1 = inlined_call_operand.hbm [shape: s32[16,16], index: 1, kind: output, shape index: {}]
  $region1: #{squeeze.1} parent=0
    #allocation0 [shape = 'u8[8192]{0}', space=vmem, size = 0x2000, scoped, tag = 'operand span for operand 1']
    #allocation1 [shape = 's32[1]{0}', space=sflag, size = 0x4, scoped, tag = 'scoped memory for squeeze.1']
    #allocation2 [shape = 'u8[4096]{0}', space=vmem, size = 0x1000, scoped, tag = 'scoped mem for input reshape']
    %2 = vsyncpa [#allocation1], 0
    %s4 = ssub.s32 4, 1
    %v5 = vld [vmem:[%s0] sm:%s4]
    %6 = vst [vmem:[#allocation2] sm:%s4] %v5
    %v7 = vld [vmem:[#allocation2] sm:$0x3]
    %vm8 = vcmask 130048
    %9 = vst.msk [vmem:[#allocation0] ss:$8 sm:$0x3] %vm8, %v7
    %v10 = vld [vmem:[#allocation2] sm:$0x3]
    %11 = vrot.lane.b32.xlu0 %v10, 112
    %v12 = vpop.permute.xlu0 %11
    %vm13 = vcmask 130048
    %s14 = scalar_lea.vmem [#allocation0], 1
    %15 = vst.msk [vmem:[%s14] ss:$8 sm:$0x3] %vm13, %v12
    %v16 = vld [vmem:[#allocation2] sm:$0x3]
    %17 = vrot.lane.b32.xlu0 %v16, 96
    %v18 = vpop.permute.xlu0 %17
    %vm19 = vcmask 130048
    %s20 = scalar_lea.vmem [#allocation0], 2
    %21 = vst.msk [vmem:[%s20] ss:$8 sm:$0x3] %vm19, %v18
    %v22 = vld [vmem:[#allocation2] sm:$0x3]
    %23 = vrot.lane.b32.xlu0 %v22, 80
    %v24 = vpop.permute.xlu0 %23
    %vm25 = vcmask 130048
    %s26 = scalar_lea.vmem [#allocation0], 3
    %27 = vst.msk [vmem:[%s26] ss:$8 sm:$0x3] %vm25, %v24
    %v28 = vld [vmem:[#allocation2] sm:$0x3]
    %29 = vrot.lane.b32.xlu0 %v28, 64
    %v30 = vpop.permute.xlu0 %29
    %vm31 = vcmask 130048
    %s32 = scalar_lea.vmem [#allocation0], 4
    %33 = vst.msk [vmem:[%s32] ss:$8 sm:$0x3] %vm31, %v30
    %v34 = vld [vmem:[#allocation2] sm:$0x3]
    %35 = vrot.lane.b32.xlu0 %v34, 48
    %v36 = vpop.permute.xlu0 %35
    %vm37 = vcmask 130048
    %s38 = scalar_lea.vmem [#allocation0], 5
    %39 = vst.msk [vmem:[%s38] ss:$8 sm:$0x3] %vm37, %v36
    %v40 = vld [vmem:[#allocation2] sm:$0x3]
    %41 = vrot.lane.b32.xlu0 %v40, 32
    %v42 = vpop.permute.xlu0 %41
    %vm43 = vcmask 130048
    %s44 = scalar_lea.vmem [#allocation0], 6
    %45 = vst.msk [vmem:[%s44] ss:$8 sm:$0x3] %vm43, %v42
    %v46 = vld [vmem:[#allocation2] sm:$0x3]
    %47 = vrot.lane.b32.xlu0 %v46, 16
    %v48 = vpop.permute.xlu0 %47
    %vm49 = vcmask 130048
    %s50 = scalar_lea.vmem [#allocation0], 7
    %51 = vst.msk [vmem:[%s50] ss:$8 sm:$0x3] %vm49, %v48
    %53 = vsyncadd [#allocation1], 0
    %s55 = sshll.u32 [#allocation0], 4
    %s56 = int_to_ptr.vmem [resolvable:$true] %s55
    %s57 = sshll.u32 %s1, 4
    %s58 = int_to_ptr.hbm [resolvable:$true] %s57
    %60 = dma.vmem_to_hbm [thread:$0]  %s56, 256, %s58, [#allocation1]
    %62 = dma.done [#allocation1], 256
    %63 = vsyncpa [#allocation1], 1

// kernel: forward.1
$region0: #{forward.1}
  #allocation0 [shape = 'u32[]', space=smem, size = 0x4, offset = 0x4, fixed_abs, tag = 'smem constant byte address 0x4 - core index']
  #allocation1 [shape = 'u32[72,128]{1,0:T(1,128)}', space=vmem, size = 0x9000, scoped, tag = 'internal scratch']
  %s0 = inlined_call_operand.vmem [shape: f32[2,3,256], index: 0, kind: input, shape index: {}]
  %s1 = inlined_call_operand.vmem [shape: f32[3,32], index: 1, kind: input, shape index: {}]
  %s2 = inlined_call_operand.vmem [shape: f32[8,32], index: 2, kind: input, shape index: {}]
  %s3 = inlined_call_operand.vmem [shape: f32[32,69], index: 3, kind: input, shape index: {}]
  %s4 = inlined_call_operand.vmem [shape: f32[1,69], index: 4, kind: input, shape index: {}]
  %s5 = inlined_call_operand.vmem [shape: f32[64,256], index: 5, kind: input, shape index: {}]
  %s6 = inlined_call_operand.vmem [shape: s32[2,256], index: 6, kind: output, shape index: {}]
  %s7 = sld [smem:[#allocation0]]
  $region34: #{forward.1} parent=0
    _
  %s9 = ssub.s32 1, %s7
  %s10 = scalar_select 0, %s9, %s7
  // Predicated region
  $region2: #{forward.1} parent=0 // pred_check
    _
  $region3: #{forward.1} parent=0 // pred_check_branch
    %12 = sbr.rel (0) target = $region5
  $region4: #{forward.1} parent=0 // pred_region
    _
  $region5: #{forward.1} parent=0 // pred_fallthru
    _
  // Predicated region
  $region6: #{forward.1} parent=0 // pred_check
    _
  $region7: #{forward.1} parent=0 // pred_check_branch
    %14 = sbr.rel (0) target = $region9
  $region8: #{forward.1} parent=0 // pred_region
    _
  $region9: #{forward.1} parent=0 // pred_fallthru
    _
  // Predicated region
  $region10: #{forward.1} parent=0 // pred_check
    _
  $region11: #{forward.1} parent=0 // pred_check_branch
    %16 = sbr.rel (0) target = $region13
  $region12: #{forward.1} parent=0 // pred_region
    _
  $region13: #{forward.1} parent=0 // pred_fallthru
    _
  // Predicated region
  $region14: #{forward.1} parent=0 // pred_check
    _
  $region15: #{forward.1} parent=0 // pred_check_branch
    %18 = sbr.rel (0) target = $region17
  $region16: #{forward.1} parent=0 // pred_region
    _
  $region17: #{forward.1} parent=0 // pred_fallthru
    _
  // Predicated region
  $region18: #{forward.1} parent=0 // pred_check
    _
  $region19: #{forward.1} parent=0 // pred_check_branch
    %20 = sbr.rel (0) target = $region21
  $region20: #{forward.1} parent=0 // pred_region
    _
  $region21: #{forward.1} parent=0 // pred_fallthru
    _
  // Predicated region
  $region22: #{forward.1} parent=0 // pred_check
    _
  $region23: #{forward.1} parent=0 // pred_check_branch
    %22 = sbr.rel (0) target = $region25
  $region24: #{forward.1} parent=0 // pred_region
    _
  $region25: #{forward.1} parent=0 // pred_fallthru
    _
  %v23 = vld [vmem:[%s0] sm:$0x77]
  %v24 = vld [vmem:[%s0 + $0x8] sm:$0x77]
  %27 = vst [vmem:[#allocation1] ss:$2 sm:$0xff] %v23
  %v28 = vld.sshfl [vmem:[#allocation1] sm:$0xff pattern:$0x75316420]
  %v29 = vld.sshfl [vmem:[#allocation1 + $0x8] sm:$0xff pattern:$0x75316420]
  %s30 = scalar_lea.vmem [#allocation1], 16
  %31 = vst [vmem:[%s30] ss:$2 sm:$0xff] %v24
  %v32 = vld.sshfl [vmem:[#allocation1 + $0x10] sm:$0xff pattern:$0x75316420]
  %v33 = vld.sshfl [vmem:[#allocation1 + $0x18] sm:$0xff pattern:$0x75316420]
  %vm38 = vcmask 1042432
  %v39 = vsel %vm38, %v28, 0.0
  %v40 = vsel %vm38, %v29, 0.0
  %v41 = vadd.f32 %v39, %v40
  %42 = vadd.xlane.f32.xlu0 %v41
  %v43 = vpop.xlane.xlu0 %42
  %v44 = vsel %vm38, %v32, 0.0
  %v45 = vsel %vm38, %v33, 0.0
  %v46 = vadd.f32 %v44, %v45
  %47 = vadd.xlane.f32.xlu0 %v46
  %v48 = vpop.xlane.xlu0 %47
  %v49 = vmul.f32 %v43, 0.00390625
  %v50 = vmul.f32 %v48, 0.00390625
  %v51 = vld [vmem:[%s1] sm:$0x1]
  %v52 = vperm.slane %v49, 0
  %v53 = vperm.slane %v50, 0
  %v54 = vperm.slane %v51, 0
  %v56 = vlaneseq
  %v57 = vshrl.u32 %v56, 7
  %59 = vset.pattern.permute.xlu0 %v57
  %60 = vperm.xlu0 %59, %v54
  %v61 = vpop.permute.xlu0 %60
  %v62 = vlaneseq
  %v63 = vshrl.u32 %v62, 7
  %v64 = vadd.s32 %v63, 8
  %65 = vset.pattern.permute.xlu0 %v64
  %66 = vperm.xlu0 %65, %v54
  %v67 = vpop.permute.xlu0 %66
  %v68 = vlaneseq
  %v69 = vshrl.u32 %v68, 7
  %v70 = vadd.s32 %v69, 16
  %71 = vset.pattern.permute.xlu0 %v70
  %72 = vperm.xlu0 %71, %v54
  %v73 = vpop.permute.xlu0 %72
  %v74 = vlaneseq
  %v75 = vshrl.u32 %v74, 7
  %v76 = vadd.s32 %v75, 24
  %77 = vset.pattern.permute.xlu0 %v76
  %78 = vperm.xlu0 %77, %v54
  %v79 = vpop.permute.xlu0 %78
  %v84 = vmul.f32 %v52, %v61
  %v85 = vmul.f32 %v52, %v67
  %v86 = vmul.f32 %v52, %v73
  %v87 = vmul.f32 %v52, %v79
  %v88 = vmul.f32 %v53, %v61
  %v89 = vmul.f32 %v53, %v67
  %v90 = vmul.f32 %v53, %v73
  %v91 = vmul.f32 %v53, %v79
  %v92 = vld [vmem:[%s1 + $0x1] sm:$0x1]
  %v93 = vperm.slane %v49, 1
  %v94 = vperm.slane %v50, 1
  %v95 = vperm.slane %v92, 0
  %v97 = vlaneseq
  %v98 = vshrl.u32 %v97, 7
  %100 = vset.pattern.permute.xlu0 %v98
  %101 = vperm.xlu0 %100, %v95
  %v102 = vpop.permute.xlu0 %101
  %v103 = vlaneseq
  %v104 = vshrl.u32 %v103, 7
  %v105 = vadd.s32 %v104, 8
  %106 = vset.pattern.permute.xlu0 %v105
  %107 = vperm.xlu0 %106, %v95
  %v108 = vpop.permute.xlu0 %107
  %v109 = vlaneseq
  %v110 = vshrl.u32 %v109, 7
  %v111 = vadd.s32 %v110, 16
  %112 = vset.pattern.permute.xlu0 %v111
  %113 = vperm.xlu0 %112, %v95
  %v114 = vpop.permute.xlu0 %113
  %v115 = vlaneseq
  %v116 = vshrl.u32 %v115, 7
  %v117 = vadd.s32 %v116, 24
  %118 = vset.pattern.permute.xlu0 %v117
  %119 = vperm.xlu0 %118, %v95
  %v120 = vpop.permute.xlu0 %119
  %v125 = vmul.f32 %v93, %v102
  %v126 = vmul.f32 %v93, %v108
  %v127 = vmul.f32 %v93, %v114
  %v128 = vmul.f32 %v93, %v120
  %v129 = vmul.f32 %v94, %v102
  %v130 = vmul.f32 %v94, %v108
  %v131 = vmul.f32 %v94, %v114
  %v132 = vmul.f32 %v94, %v120
  %v133 = vadd.f32 %v84, %v125
  %v134 = vadd.f32 %v85, %v126
  %v135 = vadd.f32 %v86, %v127
  %v136 = vadd.f32 %v87, %v128
  %v137 = vadd.f32 %v88, %v129
  %v138 = vadd.f32 %v89, %v130
  %v139 = vadd.f32 %v90, %v131
  %v140 = vadd.f32 %v91, %v132
  %v141 = vld [vmem:[%s1 + $0x2] sm:$0x1]
  %v142 = vperm.slane %v49, 2
  %v143 = vperm.slane %v50, 2
  %v144 = vperm.slane %v141, 0
  %v146 = vlaneseq
  %v147 = vshrl.u32 %v146, 7
  %149 = vset.pattern.permute.xlu0 %v147
  %150 = vperm.xlu0 %149, %v144
  %v151 = vpop.permute.xlu0 %150
  %v152 = vlaneseq
  %v153 = vshrl.u32 %v152, 7
  %v154 = vadd.s32 %v153, 8
  %155 = vset.pattern.permute.xlu0 %v154
  %156 = vperm.xlu0 %155, %v144
  %v157 = vpop.permute.xlu0 %156
  %v158 = vlaneseq
  %v159 = vshrl.u32 %v158, 7
  %v160 = vadd.s32 %v159, 16
  %161 = vset.pattern.permute.xlu0 %v160
  %162 = vperm.xlu0 %161, %v144
  %v163 = vpop.permute.xlu0 %162
  %v164 = vlaneseq
  %v165 = vshrl.u32 %v164, 7
  %v166 = vadd.s32 %v165, 24
  %167 = vset.pattern.permute.xlu0 %v166
  %168 = vperm.xlu0 %167, %v144
  %v169 = vpop.permute.xlu0 %168
  %v174 = vmul.f32 %v142, %v151
  %v175 = vmul.f32 %v142, %v157
  %v176 = vmul.f32 %v142, %v163
  %v177 = vmul.f32 %v142, %v169
  %v178 = vmul.f32 %v143, %v151
  %v179 = vmul.f32 %v143, %v157
  %v180 = vmul.f32 %v143, %v163
  %v181 = vmul.f32 %v143, %v169
  %v182 = vadd.f32 %v133, %v174
  %v183 = vadd.f32 %v134, %v175
  %v184 = vadd.f32 %v135, %v176
  %v185 = vadd.f32 %v136, %v177
  %v186 = vadd.f32 %v137, %v178
  %v187 = vadd.f32 %v138, %v179
  %v188 = vadd.f32 %v139, %v180
  %v189 = vadd.f32 %v140, %v181
  %v190 = vld [vmem:[%s2] sm:$0xff]
  %195 = vset.pattern.permute.xlu0 0
  %196 = vperm.xlu0 %195, %v182
  %v197 = vpop.permute.xlu0 %196
  %198 = vset.pattern.permute.xlu0 0
  %199 = vperm.xlu0 %198, %v183
  %v200 = vpop.permute.xlu0 %199
  %201 = vset.pattern.permute.xlu0 0
  %202 = vperm.xlu0 %201, %v184
  %v203 = vpop.permute.xlu0 %202
  %204 = vset.pattern.permute.xlu0 0
  %205 = vperm.xlu0 %204, %v185
  %v206 = vpop.permute.xlu0 %205
  %v207 = vlaneseq
  %v208 = vand.u32 %v207, 127
  %v209 = vperm.slane %v197, %v208
  %v210 = vadd.s32 %v208, 4294967288
  %v211 = vperm.slane %v200, %v210
  %vm212 = vcmask 130112
  %v213 = vsel %vm212, %v211, %v209
  %v214 = vadd.s32 %v208, 4294967280
  %v215 = vperm.slane %v203, %v214
  %vm216 = vcmask 195712
  %v217 = vsel %vm216, %v215, %v213
  %v218 = vadd.s32 %v208, 4294967272
  %v219 = vperm.slane %v206, %v218
  %vm220 = vcmask 261312
  %v221 = vsel %vm220, %v219, %v217
  %vm222 = vcmask 1042434
  %v223 = vsel %vm222, %v221, %v221
  %vm224 = vcmask 1043459
  %v225 = vsel %vm224, %v221, %v223
  %vm226 = vcmask 1044484
  %v227 = vsel %vm226, %v221, %v225
  %vm228 = vcmask 1045509
  %v229 = vsel %vm228, %v221, %v227
  %vm230 = vcmask 1046534
  %v231 = vsel %vm230, %v221, %v229
  %vm232 = vcmask 1047559
  %v233 = vsel %vm232, %v221, %v231
  %v235 = vadd.f32 %v190, %v233
  %240 = vset.pattern.permute.xlu0 0
  %241 = vperm.xlu0 %240, %v186
  %v242 = vpop.permute.xlu0 %241
  %243 = vset.pattern.permute.xlu0 0
  %244 = vperm.xlu0 %243, %v187
  %v245 = vpop.permute.xlu0 %244
  %246 = vset.pattern.permute.xlu0 0
  %247 = vperm.xlu0 %246, %v188
  %v248 = vpop.permute.xlu0 %247
  %249 = vset.pattern.permute.xlu0 0
  %250 = vperm.xlu0 %249, %v189
  %v251 = vpop.permute.xlu0 %250
  %v252 = vperm.slane %v242, %v208
  %v253 = vperm.slane %v245, %v210
  %v254 = vsel %vm212, %v253, %v252
  %v255 = vperm.slane %v248, %v214
  %v256 = vsel %vm216, %v255, %v254
  %v257 = vperm.slane %v251, %v218
  %v258 = vsel %vm220, %v257, %v256
  %v259 = vsel %vm222, %v258, %v258
  %v260 = vsel %vm224, %v258, %v259
  %v261 = vsel %vm226, %v258, %v260
  %v262 = vsel %vm228, %v258, %v261
  %v263 = vsel %vm230, %v258, %v262
  %v264 = vsel %vm232, %v258, %v263
  %v266 = vadd.f32 %v190, %v264
  %v267 = vtanh.pop %v235
  %v268 = vtanh.pop %v266
  %v269 = vld [vmem:[%s3] sm:$0xff]
  %v270 = vld [vmem:[%s3 + $0x8] sm:$0xff]
  %v271 = vld [vmem:[%s3 + $0x10] sm:$0xff]
  %v272 = vld [vmem:[%s3 + $0x18] sm:$0xff]
  %v273 = vld [vmem:[%s4] sm:$0x1]
  %v275 = vperm.slane %v273, 0
  %vm277 = vcmask 261120
  %v279 = vsel %vm277, %v267, 0
  %v282 = vsel %vm277, %v268, 0
  %284 = vmatpush.msra.mxu0 0.0
  %285 = vmatpush.msra.mxu0 0.0
  %286 = vmatpush.msra.mxu0 0.0
  %287 = vmatpush.msra.mxu0 0.0
  %288 = vmatpush.msra.mxu0 0.0
  %289 = vmatpush.msra.mxu0 0.0
  %290 = vmatpush.msra.mxu0 0.0
  %291 = vmatpush.msra.mxu0 0.0
  %292 = vmatpush.msra.mxu0 0.0
  %293 = vmatpush.msra.mxu0 0.0
  %294 = vmatpush.msra.mxu0 0.0
  %295 = vmatpush.msra.mxu0 0.0
  %296 = vmatpush.msra.mxu0 %v272
  %297 = vmatpush.msra.mxu0 %v271
  %298 = vmatpush.msra.mxu0 %v270
  %299 = vmatpush.msra.mxu0 %v269
  %300 = vmatmul.f32.gmra.mxu0 %v279
  %v301 = vpop.f32.mrf.mxu0
  %v302 = vadd.f32 %v275, %v301
  %303 = vmatmul.f32.gmra.mxu0 %v282
  %v304 = vpop.f32.mrf.mxu0
  %v305 = vadd.f32 %v275, %v304
  %306 = vdwg.mxu0
  %vm307 = vcmask 39936
  %v308 = vsel %vm307, %v302, -inf
  %309 = vmax.xlane.f32.xlu0 %v308
  %v310 = vpop.xlane.xlu0 %309
  %v311 = vsel %vm307, %v305, -inf
  %312 = vmax.xlane.f32.xlu0 %v311
  %v313 = vpop.xlane.xlu0 %312
  %v314 = vsub.f32 %v302, %v310
  %v315 = vsub.f32 %v305, %v313
  %v316 = vmul.f32 %v314, 1.442695
  %v317 = vpow.pop %v316
  %v318 = vmul.f32 %v315, 1.442695
  %v319 = vpow.pop %v318
  %v320 = vsel %vm307, %v317, 0.0
  %321 = vadd.xlane.f32.xlu0 %v320
  %v322 = vpop.xlane.xlu0 %321
  %v323 = vsel %vm307, %v319, 0.0
  %324 = vadd.xlane.f32.xlu0 %v323
  %v325 = vpop.xlane.xlu0 %324
  %v326 = vrcp.pop %v322
  %v327 = vmul.f32 %v322, %v326
  %v328 = vsub.f32 1.0, %v327
  %v329 = vmul.f32 %v326, %v328
  %v330 = vadd.f32 %v326, %v329
  %vm331 = vweird.f32 %v322
  %vm332 = vweird.f32 %v326
  %vm333 = vmor %vm331, %vm332
  %v334 = vsel %vm333, %v326, %v330
  %v335 = vand.u32 2147483647, %v322
  %vm336 = vcmp.eq.f32.partialorder %v335, 8.507059e+37
  %v337 = vand.u32 %v322, 2147483648
  %v338 = vor.u32 1.1754944e-38, %v337
  %v339 = vsel %vm336, %v338, %v334
  %v340 = vmul.f32 %v317, %v339
  %v341 = vrcp.pop %v325
  %v342 = vmul.f32 %v325, %v341
  %v343 = vsub.f32 1.0, %v342
  %v344 = vmul.f32 %v341, %v343
  %v345 = vadd.f32 %v341, %v344
  %vm346 = vweird.f32 %v325
  %vm347 = vweird.f32 %v341
  %vm348 = vmor %vm346, %vm347
  %v349 = vsel %vm348, %v341, %v345
  %v350 = vand.u32 2147483647, %v325
  %vm351 = vcmp.eq.f32.partialorder %v350, 8.507059e+37
  %v352 = vand.u32 %v325, 2147483648
  %v353 = vor.u32 1.1754944e-38, %v352
  %v354 = vsel %vm351, %v353, %v349
  %v355 = vmul.f32 %v319, %v354
  %v356 = vand.u32 2147483647, %v302
  %v357 = vand.u32 2147483647, %v305
  %v358 = vsub.f32 0.0, %v356
  %v359 = vsub.f32 0.0, %v357
  %v360 = vmul.f32 %v358, 1.442695
  %v361 = vpow.pop %v360
  %v362 = vmul.f32 %v359, 1.442695
  %v363 = vpow.pop %v362
  %v364 = vadd.f32 %v361, 1.0
  %v365 = vadd.f32 %v363, 1.0
  %v366 = vrcp.pop %v364
  %v367 = vmul.f32 %v364, %v366
  %v368 = vsub.f32 1.0, %v367
  %v369 = vmul.f32 %v366, %v368
  %v370 = vadd.f32 %v366, %v369
  %vm371 = vweird.f32 %v364
  %vm372 = vweird.f32 %v366
  %vm373 = vmor %vm371, %vm372
  %v374 = vsel %vm373, %v366, %v370
  %v375 = vand.u32 2147483647, %v364
  %vm376 = vcmp.eq.f32.partialorder %v375, 8.507059e+37
  %v377 = vand.u32 %v364, 2147483648
  %v378 = vor.u32 1.1754944e-38, %v377
  %v379 = vsel %vm376, %v378, %v374
  %v380 = vmul.f32 1.0, %v379
  %v381 = vrcp.pop %v365
  %v382 = vmul.f32 %v365, %v381
  %v383 = vsub.f32 1.0, %v382
  %v384 = vmul.f32 %v381, %v383
  %v385 = vadd.f32 %v381, %v384
  %vm386 = vweird.f32 %v365
  %vm387 = vweird.f32 %v381
  %vm388 = vmor %vm386, %vm387
  %v389 = vsel %vm388, %v381, %v385
  %v390 = vand.u32 2147483647, %v365
  %vm391 = vcmp.eq.f32.partialorder %v390, 8.507059e+37
  %v392 = vand.u32 %v365, 2147483648
  %v393 = vor.u32 1.1754944e-38, %v392
  %v394 = vsel %vm391, %v393, %v389
  %v395 = vmul.f32 1.0, %v394
  %vm396 = vcmp.ge.f32.partialorder %v302, 0.0
  %vm397 = vcmp.ge.f32.partialorder %v305, 0.0
  %v398 = vmul.f32 %v361, %v380
  %v399 = vmul.f32 %v363, %v395
  %v400 = vsel %vm396, %v380, %v398
  %v401 = vsel %vm397, %v395, %v399
  %402 = vxpose.xlu0.b32.start [1/16] %v340, 128
  %403 = vxpose.xlu0.b32.cont [2/16] 0.0, 128
  %404 = vxpose.xlu0.b32.cont [3/16] 0.0, 128
  %405 = vxpose.xlu0.b32.cont [4/16] 0.0, 128
  %406 = vxpose.xlu0.b32.cont [5/16] 0.0, 128
  %407 = vxpose.xlu0.b32.cont [6/16] 0.0, 128
  %408 = vxpose.xlu0.b32.cont [7/16] 0.0, 128
  %409 = vxpose.xlu0.b32.cont [8/16] 0.0, 128
  %410 = vxpose.xlu0.b32.cont [9/16] 0.0, 128
  %411 = vxpose.xlu0.b32.cont [10/16] 0.0, 128
  %412 = vxpose.xlu0.b32.cont [11/16] 0.0, 128
  %413 = vxpose.xlu0.b32.cont [12/16] 0.0, 128
  %414 = vxpose.xlu0.b32.cont [13/16] 0.0, 128
  %415 = vxpose.xlu0.b32.cont [14/16] 0.0, 128
  %416 = vxpose.xlu0.b32.cont [15/16] 0.0, 128
  %417 = vxpose.xlu0.b32.end [16/16] 0.0, 128
  %v418 = vpop.trf.xlu0
  %v419 = vpop.trf.xlu0
  %v420 = vpop.trf.xlu0
  %v421 = vpop.trf.xlu0
  %v422 = vpop.trf.xlu0
  %v423 = vpop.trf.xlu0
  %v424 = vpop.trf.xlu0
  %v425 = vpop.trf.xlu0
  %v426 = vpop.trf.xlu0
  %v427 = vpop.trf.xlu0
  %v428 = vpop.trf.xlu0
  %v429 = vpop.trf.xlu0
  %v430 = vpop.trf.xlu0
  %v431 = vpop.trf.xlu0
  %v432 = vpop.trf.xlu0
  %v433 = vpop.trf.xlu0
  %434 = vxpose.xlu0.b32.start [1/16] %v355, 128
  %435 = vxpose.xlu0.b32.cont [2/16] 0.0, 128
  %436 = vxpose.xlu0.b32.cont [3/16] 0.0, 128
  %437 = vxpose.xlu0.b32.cont [4/16] 0.0, 128
  %438 = vxpose.xlu0.b32.cont [5/16] 0.0, 128
  %439 = vxpose.xlu0.b32.cont [6/16] 0.0, 128
  %440 = vxpose.xlu0.b32.cont [7/16] 0.0, 128
  %441 = vxpose.xlu0.b32.cont [8/16] 0.0, 128
  %442 = vxpose.xlu0.b32.cont [9/16] 0.0, 128
  %443 = vxpose.xlu0.b32.cont [10/16] 0.0, 128
  %444 = vxpose.xlu0.b32.cont [11/16] 0.0, 128
  %445 = vxpose.xlu0.b32.cont [12/16] 0.0, 128
  %446 = vxpose.xlu0.b32.cont [13/16] 0.0, 128
  %447 = vxpose.xlu0.b32.cont [14/16] 0.0, 128
  %448 = vxpose.xlu0.b32.cont [15/16] 0.0, 128
  %449 = vxpose.xlu0.b32.end [16/16] 0.0, 128
  %v450 = vpop.trf.xlu0
  %v451 = vpop.trf.xlu0
  %v452 = vpop.trf.xlu0
  %v453 = vpop.trf.xlu0
  %v454 = vpop.trf.xlu0
  %v455 = vpop.trf.xlu0
  %v456 = vpop.trf.xlu0
  %v457 = vpop.trf.xlu0
  %v458 = vpop.trf.xlu0
  %v459 = vpop.trf.xlu0
  %v460 = vpop.trf.xlu0
  %v461 = vpop.trf.xlu0
  %v462 = vpop.trf.xlu0
  %v463 = vpop.trf.xlu0
  %v464 = vpop.trf.xlu0
  %v465 = vpop.trf.xlu0
  %vm466 = vcmask 64512
  %v467 = vsel %vm466, %v418, 0.0
  %469 = vrot.lane.b32.xlu0 %v450, 8
  %v470 = vpop.permute.xlu0 %469
  %v472 = vsel %vm466, 0.0, %v470
  %v474 = vrot.slane %v472, 4
  %vm476 = vcmask 1043456
  %v477 = vsel %vm476, %v467, %v474
  %480 = vrot.lane.b32.xlu0 %v400, 123
  %v481 = vpop.permute.xlu0 %480
  %482 = vrot.lane.b32.xlu0 %v401, 123
  %v483 = vpop.permute.xlu0 %482
  %vm486 = vcmask 130048
  %v488 = vsel %vm486, %v477, 0
  %490 = vmatpush.msra.mxu0 0.0
  %491 = vmatpush.msra.mxu0 0.0
  %492 = vmatpush.msra.mxu0 0.0
  %493 = vmatpush.msra.mxu0 0.0
  %494 = vmatpush.msra.mxu0 0.0
  %495 = vmatpush.msra.mxu0 0.0
  %496 = vmatpush.msra.mxu0 0.0
  %497 = vmatpush.msra.mxu0 0.0
  %498 = vmatpush.msra.mxu0 0.0
  %499 = vmatpush.msra.mxu0 0.0
  %500 = vmatpush.msra.mxu0 0.0
  %501 = vmatpush.msra.mxu0 0.0
  %502 = vmatpush.msra.mxu0 0.0
  %503 = vmatpush.msra.mxu0 0.0
  %504 = vmatpush.msra.mxu0 %v483
  %505 = vmatpush.msra.mxu0 %v481
  %506 = vmatmul.f32.gmra.mxu0 %v488
  %v507 = vpop.f32.mrf.mxu0
  %v508 = vadd.f32 0.0, %v507
  %509 = vdwg.mxu0
  %v510 = vld [vmem:[%s5] sm:$0xff]
  %v511 = vld [vmem:[%s5 + $0x8] sm:$0xff]
  %v512 = vld [vmem:[%s5 + $0x10] sm:$0xff]
  %v513 = vld [vmem:[%s5 + $0x18] sm:$0xff]
  %v514 = vld [vmem:[%s5 + $0x20] sm:$0xff]
  %v515 = vld [vmem:[%s5 + $0x28] sm:$0xff]
  %v516 = vld [vmem:[%s5 + $0x30] sm:$0xff]
  %v517 = vld [vmem:[%s5 + $0x38] sm:$0xff]
  %v518 = vld [vmem:[%s5 + $0x40] sm:$0xff]
  %v519 = vld [vmem:[%s5 + $0x48] sm:$0xff]
  %v520 = vld [vmem:[%s5 + $0x50] sm:$0xff]
  %v521 = vld [vmem:[%s5 + $0x58] sm:$0xff]
  %v522 = vld [vmem:[%s5 + $0x60] sm:$0xff]
  %v523 = vld [vmem:[%s5 + $0x68] sm:$0xff]
  %v524 = vld [vmem:[%s5 + $0x70] sm:$0xff]
  %v525 = vld [vmem:[%s5 + $0x78] sm:$0xff]
  %vm526 = vcmask 523264
  %v528 = vsel %vm526, %v508, 0
  %530 = vmatpush.msra.mxu0 0.0
  %531 = vmatpush.msra.mxu0 0.0
  %532 = vmatpush.msra.mxu0 0.0
  %533 = vmatpush.msra.mxu0 0.0
  %534 = vmatpush.msra.mxu0 0.0
  %535 = vmatpush.msra.mxu0 0.0
  %536 = vmatpush.msra.mxu0 0.0
  %537 = vmatpush.msra.mxu0 0.0
  %538 = vmatpush.msra.mxu0 %v524
  %539 = vmatpush.msra.mxu0 %v522
  %540 = vmatpush.msra.mxu0 %v520
  %541 = vmatpush.msra.mxu0 %v518
  %542 = vmatpush.msra.mxu0 %v516
  %543 = vmatpush.msra.mxu0 %v514
  %544 = vmatpush.msra.mxu0 %v512
  %545 = vmatpush.msra.mxu0 %v510
  %546 = vmatmul.f32.gmra.mxu0 %v528
  %v547 = vpop.f32.mrf.mxu0
  %v548 = vadd.f32 0.0, %v547
  %549 = vdwg.mxu0
  %550 = vmatpush.msra.mxu0 0.0
  %551 = vmatpush.msra.mxu0 0.0
  %552 = vmatpush.msra.mxu0 0.0
  %553 = vmatpush.msra.mxu0 0.0
  %554 = vmatpush.msra.mxu0 0.0
  %555 = vmatpush.msra.mxu0 0.0
  %556 = vmatpush.msra.mxu0 0.0
  %557 = vmatpush.msra.mxu0 0.0
  %558 = vmatpush.msra.mxu0 %v525
  %559 = vmatpush.msra.mxu0 %v523
  %560 = vmatpush.msra.mxu0 %v521
  %561 = vmatpush.msra.mxu0 %v519
  %562 = vmatpush.msra.mxu0 %v517
  %563 = vmatpush.msra.mxu0 %v515
  %564 = vmatpush.msra.mxu0 %v513
  %565 = vmatpush.msra.mxu0 %v511
  %566 = vmatmul.f32.gmra.mxu0 %v528
  %v567 = vpop.f32.mrf.mxu0
  %v568 = vadd.f32 0.0, %v567
  %569 = vdwg.mxu0
  %v572 = vrot.slane %v548, 7
  %v573 = vrot.slane %v568, 7
  %vm576 = vcmp.gt.f32.partialorder %v548, %v572
  %vm577 = vcmp.gt.f32.partialorder %v568, %v573
  %v578 = vsel %vm576, %v548, %v572
  %v579 = vsel %vm577, %v568, %v573
  %v580 = vsel %vm576, 1, 0
  %v581 = vsel %vm577, 1, 0
  %v584 = vrot.slane %v578, 7
  %v585 = vrot.slane %v579, 7
  %vm588 = vcmp.gt.f32.partialorder %v548, %v584
  %vm589 = vcmp.gt.f32.partialorder %v568, %v585
  %v590 = vsel %vm588, %v548, %v584
  %v591 = vsel %vm589, %v568, %v585
  %v592 = vrot.slane %v580, 7
  %v593 = vrot.slane %v581, 7
  %v594 = vsel %vm588, 2, %v592
  %v595 = vsel %vm589, 2, %v593
  %v598 = vrot.slane %v590, 7
  %v599 = vrot.slane %v591, 7
  %vm602 = vcmp.gt.f32.partialorder %v548, %v598
  %vm603 = vcmp.gt.f32.partialorder %v568, %v599
  %v604 = vrot.slane %v594, 7
  %v605 = vrot.slane %v595, 7
  %v606 = vsel %vm602, 3, %v604
  %v607 = vsel %vm603, 3, %v605
  %v608 = vrot.slane %v606, 3
  %v609 = vrot.slane %v607, 3
  %v610 = vrot.slane %v606, 6
  %v611 = vrot.slane %v607, 6
  %vm612 = vcmask 1040384
  %v613 = vsel %vm612, %v608, %v610
  %v614 = vsel %vm612, %v609, %v611
  %v615 = vrot.slane %v614, 6
  %vm616 = vcmask 1041408
  %v617 = vsel %vm616, %v613, %v615
  %618 = vst [vmem:[%s6] sm:$0xf] %v617
  // Predicated region
  $region26: #{forward.1} parent=0 // pred_check
    _
  $region27: #{forward.1} parent=0 // pred_check_branch
    %620 = sbr.rel (0) target = $region29
  $region28: #{forward.1} parent=0 // pred_region
    _
  $region29: #{forward.1} parent=0 // pred_fallthru
    _
  // Predicated region
  $region30: #{forward.1} parent=0 // pred_check
    _
  $region31: #{forward.1} parent=0 // pred_check_branch
    %622 = sbr.rel (0) target = $region33
  $region32: #{forward.1} parent=0 // pred_region
    _
  $region33: #{forward.1} parent=0 // pred_fallthru
    _

</llo_original>
